<compile_context>
chip_gen: v5e
topology: v5e:2x2
jax: 0.10.0
libtpu: 0.0.40
codegen_flags: <defaults>
</compile_context>

<pallas_src>
import math

import jax
import jax.numpy as jnp
from jax.experimental import pallas as pl
from jax.experimental.pallas import tpu as pltpu


def _multi_linear_kernel(x_ref, w_ref, b_ref, o_ref):
    # x_ref: (G, TB, Fin)   w_ref: (G, Fin, Fout)   b_ref: (G, 1, Fout)
    # o_ref: (G, TB, Fout)
    prod = jnp.einsum(
        "gbi,gio->gbo", x_ref[...], w_ref[...],
        preferred_element_type=jnp.float32)          # batched MXU matmul, f32 acc
    o_ref[...] = (prod + b_ref[...]).astype(o_ref.dtype)


def _choose_group_size(n, tb, fin, fout, itemsize,
                       vmem_budget_bytes=12 * 1024 * 1024):
    """Pick how many networks to process per grid step.

    Budget: 2 (double-buffer) x (x_tile + w_tile + b_tile + out_tile) <= ~12 MiB,
    which fits the default scoped-VMEM limit on v5e/v6e/v7x with headroom.
    Capped so the network-group grid axis has >= 2 steps when N >= 2 (lets the
    'parallel' axis feed both v7x TensorCores)."""
    per_net = (tb * fin + fin * fout + fout + tb * fout) * itemsize
    g = max(1, vmem_budget_bytes // (2 * per_net))
    if n >= 2:
        g = min(g, (n + 1) // 2)
    return int(min(g, n))


def multi_network_linear(x, weight, bias, *, batch_tile=512, group_size=None):
    """Pallas forward of MultiNetworkLinear (implementation='bmm').

    x:      (N, B, Fin)
    weight: (N, Fout, Fin)   -- PyTorch layout
    bias:   (N, Fout)
    returns (N, B, Fout)
    """
    n, b, fin = x.shape
    fout = weight.shape[1]
    assert weight.shape == (n, fout, fin)
    assert bias.shape == (n, fout)

    # One transpose in the wrapper -> (N, Fin, Fout); kernel does x @ w directly.
    w_t = jnp.swapaxes(weight, 1, 2)
    bias3 = bias.reshape(n, 1, fout)

    # Batch tiling (second grid axis) bounds VMEM when B is large.
    tb = b if b <= batch_tile else batch_tile
    pad_b = (-b) % tb
    b_pad = b + pad_b

    itemsize = jnp.dtype(x.dtype).itemsize
    g = group_size if group_size is not None else _choose_group_size(
        n, tb, fin, fout, itemsize)
    pad_n = (-n) % g
    n_pad = n + pad_n

    if pad_n or pad_b:
        x = jnp.pad(x, ((0, pad_n), (0, pad_b), (0, 0)))
    if pad_n:
        w_t = jnp.pad(w_t, ((0, pad_n), (0, 0), (0, 0)))
        bias3 = jnp.pad(bias3, ((0, pad_n), (0, 0), (0, 0)))

    n_groups = n_pad // g
    b_tiles = b_pad // tb

    out = pl.pallas_call(
        _multi_linear_kernel,
        out_shape=jax.ShapeDtypeStruct((n_pad, b_pad, fout), x.dtype),
        grid_spec=pltpu.PrefetchScalarGridSpec(
            num_scalar_prefetch=0,
            grid=(n_groups, b_tiles),
            in_specs=[
                pl.BlockSpec((g, tb, fin), lambda i, j: (i, j, 0)),
                pl.BlockSpec((g, fin, fout), lambda i, j: (i, 0, 0)),
                pl.BlockSpec((g, 1, fout), lambda i, j: (i, 0, 0)),
            ],
            out_specs=pl.BlockSpec((g, tb, fout), lambda i, j: (i, j, 0)),
        ),
        compiler_params=pltpu.CompilerParams(
            dimension_semantics=("parallel", "parallel")),
    )(x, w_t, bias3)

    if pad_n or pad_b:
        out = out[:n, :b]
    return out


def init_params(key, num_networks, in_features, out_features):
    """Deterministic init mirroring MultiNetworkLinear.reset_parameters:
    kaiming_uniform_(a=sqrt(5), nonlinearity='leaky_relu') for weight
    (bound = sqrt(3) * gain / sqrt(fan_in) with gain = sqrt(2/(1+5))
           = 1/sqrt(fan_in)),
    and standard bias init with bound = 1/sqrt(fan_in)."""
    kw, kb = jax.random.split(key)
    fan_in = in_features
    gain = math.sqrt(2.0 / (1.0 + 5.0))           # leaky_relu, a = sqrt(5)
    std = gain / math.sqrt(fan_in)
    w_bound = math.sqrt(3.0) * std                 # == 1/sqrt(fan_in)
    b_bound = 1.0 / math.sqrt(fan_in)
    weight = jax.random.uniform(
        kw, (num_networks, out_features, in_features),
        minval=-w_bound, maxval=w_bound, dtype=jnp.float32)
    bias = jax.random.uniform(
        kb, (num_networks, out_features),
        minval=-b_bound, maxval=b_bound, dtype=jnp.float32)
    return weight, bias


if __name__ == "__main__":
    num_networks = 4
    batch = 8
    in_features = 32
    out_features = 16

    key = jax.random.PRNGKey(0)
    kx, kp = jax.random.split(key)

    x = jax.random.normal(
        kx, (num_networks, batch, in_features), dtype=jnp.float32)
    weight, bias = init_params(kp, num_networks, in_features, out_features)

    out = multi_network_linear(x, weight, bias)
    out = jax.block_until_ready(out)

    # Reference check in plain JAX (same math as the torch.bmm path).
    ref = jnp.einsum("nbi,noi->nbo", x, weight) + bias[:, None, :]
    assert out.shape == (num_networks, batch, out_features)
    assert jnp.allclose(out, ref, atol=1e-5, rtol=1e-5)

    print("KERNEL_OK")
</pallas_src>

<mosaic_0001>
module attributes {stable_mosaic.version = 11 : i64} {
  func.func @_multi_linear_kernel(%arg0: i32, %arg1: i32, %arg2: memref<2x8x32xf32, #tpu.memory_space<vmem>>, %arg3: memref<2x32x16xf32, #tpu.memory_space<vmem>>, %arg4: memref<2x1x16xf32, #tpu.memory_space<vmem>>, %arg5: memref<2x8x16xf32, #tpu.memory_space<vmem>>) attributes {dimension_semantics = [#tpu.dimension_semantics<parallel>, #tpu.dimension_semantics<parallel>], iteration_bounds = array<i64: 2, 1>, scalar_prefetch = 0 : i64, scratch_operands = 0 : i64, tpu.core_type = #tpu.core_type<tc>, window_params = [{transform_indices = @transform_0, window_bounds = array<i64: 2, 8, 32>}, {transform_indices = @transform_1, window_bounds = array<i64: 2, 32, 16>}, {transform_indices = @transform_2, window_bounds = array<i64: 2, 1, 16>}, {transform_indices = @transform_3, window_bounds = array<i64: 2, 8, 16>}]} {
    %c0 = arith.constant 0 : index
    %c0_0 = arith.constant 0 : index
    %c0_1 = arith.constant 0 : index
    %0 = vector.load %arg2[%c0, %c0_0, %c0_1] : memref<2x8x32xf32, #tpu.memory_space<vmem>>, vector<2x8x32xf32>
    %c0_2 = arith.constant 0 : index
    %c0_3 = arith.constant 0 : index
    %c0_4 = arith.constant 0 : index
    %1 = vector.load %arg3[%c0_2, %c0_3, %c0_4] : memref<2x32x16xf32, #tpu.memory_space<vmem>>, vector<2x32x16xf32>
    "tpu.trace_start"() <{level = 10 : i32, message = "gbi,gio->gbo"}> : () -> ()
    %cst = arith.constant dense<0.000000e+00> : vector<2x8x16xf32>
    %2 = tpu.matmul %0, %1, %cst {dimension_numbers = #tpu.dot_dimension_numbers<[2], [1], [1], [2], [0, 0, 0, 1, 1, 2], [0], [0]>} : vector<2x8x32xf32>, vector<2x32x16xf32>, vector<2x8x16xf32> -> vector<2x8x16xf32>
    "tpu.trace_stop"() : () -> ()
    %c0_5 = arith.constant 0 : index
    %c0_6 = arith.constant 0 : index
    %c0_7 = arith.constant 0 : index
    %3 = vector.load %arg4[%c0_5, %c0_6, %c0_7] : memref<2x1x16xf32, #tpu.memory_space<vmem>>, vector<2x1x16xf32>
    %4 = vector.broadcast %3 : vector<2x1x16xf32> to vector<2x8x16xf32>
    %5 = arith.addf %2, %4 : vector<2x8x16xf32>
    %c0_8 = arith.constant 0 : index
    %c0_9 = arith.constant 0 : index
    %c0_10 = arith.constant 0 : index
    %6 = vector.load %arg5[%c0_8, %c0_9, %c0_10] : memref<2x8x16xf32, #tpu.memory_space<vmem>>, vector<2x8x16xf32>
    tpu.vector_store %arg5[%c0_8, %c0_9, %c0_10], %5 {strides = array<i32>} : memref<2x8x16xf32, #tpu.memory_space<vmem>>, vector<2x8x16xf32>,
    return
  }
  func.func @transform_0(%arg0: i32, %arg1: i32) -> (i32, i32, i32) {
    %c0_i32 = arith.constant 0 : i32
    %c0_i32_0 = arith.constant 0 : i32
    return %arg0, %arg1, %c0_i32 : i32, i32, i32
  }
  func.func @transform_1(%arg0: i32, %arg1: i32) -> (i32, i32, i32) {
    %c0_i32 = arith.constant 0 : i32
    %c0_i32_0 = arith.constant 0 : i32
    %c0_i32_1 = arith.constant 0 : i32
    return %arg0, %c0_i32, %c0_i32_0 : i32, i32, i32
  }
  func.func @transform_2(%arg0: i32, %arg1: i32) -> (i32, i32, i32) {
    %c0_i32 = arith.constant 0 : i32
    %c0_i32_0 = arith.constant 0 : i32
    %c0_i32_1 = arith.constant 0 : i32
    return %arg0, %c0_i32, %c0_i32_0 : i32, i32, i32
  }
  func.func @transform_3(%arg0: i32, %arg1: i32) -> (i32, i32, i32) {
    %c0_i32 = arith.constant 0 : i32
    %c0_i32_0 = arith.constant 0 : i32
    return %arg0, %arg1, %c0_i32 : i32, i32, i32
  }
}

</mosaic_0001>

<llo_original>
// kernel: tpu_custom_call.1
$region0: #{tpu_custom_call.1}
  #allocation0 [shape = 'u32[]', space=smem, size = 0x4, offset = 0x4, fixed_abs, tag = 'smem constant byte address 0x4 - core index']
  #allocation1 [shape = 'u32[72,128]{1,0:T(1,128)}', space=vmem, size = 0x9000, scoped, tag = 'internal scratch']
  %s0 = inlined_call_operand.vmem [shape: f32[4,8,32], index: 0, kind: input, shape index: {}]
  %s1 = inlined_call_operand.vmem [shape: f32[4,32,16], index: 1, kind: input, shape index: {}]
  %s2 = inlined_call_operand.vmem [shape: f32[4,1,16], index: 2, kind: input, shape index: {}]
  %s3 = inlined_call_operand.hbm [shape: f32[4,8,16], index: 3, kind: output, shape index: {}]
  %s4 = sld [smem:[#allocation0]]
  $region45: #{tpu_custom_call.1} parent=0
    _
  %s6 = ssub.s32 1, %s4
  %s7 = scalar_select 0, %s6, %s4
  $region1: #{tpu_custom_call.1} parent=0
    #allocation2 [shape = 'u8[16384]{0}', space=vmem, size = 0x4000, scoped, tag = 'output window, operand 0']
    #allocation3 [shape = 's32[2]{0}', space=sflag, size = 0x8, scoped, tag = 'scoped memory for tpu_custom_call.1']
    %8 = vsyncpa [#allocation3], 0
    %s9 = scalar_lea.sflag [#allocation3], 1
    %10 = vsyncpa %s9, 0
    loop: start=0, step=1, limit=4
    $region2: #{tpu_custom_call.1} parent=1 // loop_pre_header
      _
    $region3: #{tpu_custom_call.1} parent=1 // loop_header
      %s12 = sphi 0, %s16
      %p13 = scmp.ge.s32.totalorder %s12, 4
      %s19 = sphi 0, %s31
      %s20 = sphi 0, %s27
      %s21 = sphi 0, %s19
      %s22 = sphi 0, %s20
      %s23 = sphi 0, %s21
      %s24 = sphi 0, %s22
      %s36 = sphi 0, %s38
      %s39 = sphi 0, %s36
      %s40 = sphi 0, %s39
      %s56 = sphi 0, %s40
      %s62 = sphi 0, %s64
      %s65 = sphi 0, %s62
      %s66 = sphi 0, %s65
      %s82 = sphi 0, %s66
      %s88 = sphi 0, %s90
      %s91 = sphi 0, %s88
      %s92 = sphi 0, %s91
      %s108 = sphi 0, %s92
      %s116 = sphi 0, %s118
      %s119 = sphi 0, %s116
      %s120 = sphi 0, %s119
      %s136 = sphi 0, %s120
    $region4: #{tpu_custom_call.1} parent=1 // loop_header_branch
      %15 = sbr.rel (%p13) target = $region8
    $region5: #{tpu_custom_call.1} parent=1 // loop_body
      %s17 = ssub.s32 %s12, 1
      %s18 = ssub.s32 %s12, 2
      %s25 = sadd.s32 1, %s20
      %p26 = scmp.ge.s32.totalorder %s25, 1
      %s27 = scalar_select %p26, 0, %s25
      %s28 = sadd.s32 1, %s19
      %s29 = scalar_select %p26, %s28, %s19
      %p30 = scmp.ge.s32.totalorder %s29, 2
      %s31 = scalar_select %p30, 0, %s29
      %s32 = ssub.s32 %s19, %s31
      %s33 = ssub.s32 %s20, %s27
      %s34 = sor.u32 %s32, %s33
      %p35 = scmp.eq.s32.totalorder %s34, 0
      %s37 = sadd.s32 %s36, 1
      %s38 = scalar_select %p35, %s36, %s37
      %p41 = pneg %p35
      %p42 = scmp.eq.s32.totalorder %s12, 1
      %p43 = por %p41, %p42
      %p44 = scmp.ne.s32.totalorder %s36, %s39
      %p45 = scmp.eq.s32.totalorder %s12, 0
      %p46 = por %p44, %p45
      %p47 = scmp.ne.s32.totalorder %s36, %s39
      %p48 = scmp.eq.s32.totalorder %s17, 1
      %p49 = por %p47, %p48
      %p50 = scmp.ne.s32.totalorder %s39, %s40
      %p51 = scmp.eq.s32.totalorder %s17, 0
      %p52 = por %p50, %p51
      %p53 = scmp.ne.s32.totalorder %s39, %s40
      %p54 = scmp.eq.s32.totalorder %s18, 1
      %p55 = por %p53, %p54
      %p57 = scmp.ne.s32.totalorder %s40, %s56
      %p58 = scmp.eq.s32.totalorder %s18, 0
      %p59 = por %p57, %p58
      %s60 = ssub.s32 %s19, %s31
      %p61 = scmp.eq.s32.totalorder %s60, 0
      %s63 = sadd.s32 %s62, 1
      %s64 = scalar_select %p61, %s62, %s63
      %p67 = pneg %p61
      %p68 = scmp.eq.s32.totalorder %s12, 1
      %p69 = por %p67, %p68
      %p70 = scmp.ne.s32.totalorder %s62, %s65
      %p71 = scmp.eq.s32.totalorder %s12, 0
      %p72 = por %p70, %p71
      %p73 = scmp.ne.s32.totalorder %s62, %s65
      %p74 = scmp.eq.s32.totalorder %s17, 1
      %p75 = por %p73, %p74
      %p76 = scmp.ne.s32.totalorder %s65, %s66
      %p77 = scmp.eq.s32.totalorder %s17, 0
      %p78 = por %p76, %p77
      %p79 = scmp.ne.s32.totalorder %s65, %s66
      %p80 = scmp.eq.s32.totalorder %s18, 1
      %p81 = por %p79, %p80
      %p83 = scmp.ne.s32.totalorder %s66, %s82
      %p84 = scmp.eq.s32.totalorder %s18, 0
      %p85 = por %p83, %p84
      %s86 = ssub.s32 %s19, %s31
      %p87 = scmp.eq.s32.totalorder %s86, 0
      %s89 = sadd.s32 %s88, 1
      %s90 = scalar_select %p87, %s88, %s89
      %p93 = pneg %p87
      %p94 = scmp.eq.s32.totalorder %s12, 1
      %p95 = por %p93, %p94
      %p96 = scmp.ne.s32.totalorder %s88, %s91
      %p97 = scmp.eq.s32.totalorder %s12, 0
      %p98 = por %p96, %p97
      %p99 = scmp.ne.s32.totalorder %s88, %s91
      %p100 = scmp.eq.s32.totalorder %s17, 1
      %p101 = por %p99, %p100
      %p102 = scmp.ne.s32.totalorder %s91, %s92
      %p103 = scmp.eq.s32.totalorder %s17, 0
      %p104 = por %p102, %p103
      %p105 = scmp.ne.s32.totalorder %s91, %s92
      %p106 = scmp.eq.s32.totalorder %s18, 1
      %p107 = por %p105, %p106
      %p109 = scmp.ne.s32.totalorder %s92, %s108
      %p110 = scmp.eq.s32.totalorder %s18, 0
      %p111 = por %p109, %p110
      %s112 = ssub.s32 %s19, %s31
      %s113 = ssub.s32 %s20, %s27
      %s114 = sor.u32 %s112, %s113
      %p115 = scmp.eq.s32.totalorder %s114, 0
      %s117 = sadd.s32 %s116, 1
      %s118 = scalar_select %p115, %s116, %s117
      %p121 = pneg %p115
      %p122 = scmp.eq.s32.totalorder %s12, 1
      %p123 = por %p121, %p122
      %p124 = scmp.ne.s32.totalorder %s116, %s119
      %p125 = scmp.eq.s32.totalorder %s12, 0
      %p126 = por %p124, %p125
      %p127 = scmp.ne.s32.totalorder %s116, %s119
      %p128 = scmp.eq.s32.totalorder %s17, 1
      %p129 = por %p127, %p128
      %p130 = scmp.ne.s32.totalorder %s119, %s120
      %p131 = scmp.eq.s32.totalorder %s17, 0
      %p132 = por %p130, %p131
      %p133 = scmp.ne.s32.totalorder %s119, %s120
      %p134 = scmp.eq.s32.totalorder %s18, 1
      %p135 = por %p133, %p134
      %p137 = scmp.ne.s32.totalorder %s120, %s136
      %p138 = scmp.eq.s32.totalorder %s18, 0
      %p139 = por %p137, %p138
      %p140 = scmp.le.s32.totalorder 1, %s12
      %p141 = scmp.lt.s32.totalorder %s12, 3
      %p142 = pnand %p140, %p141
      %p143 = pneg %p142
      // Predicated region
      $region9: #{tpu_custom_call.1} parent=5 // pred_check
        _
      $region10: #{tpu_custom_call.1} parent=5 // pred_check_branch
        %145 = sbr.rel (%p142) target = $region12
      $region11: #{tpu_custom_call.1} parent=5 // pred_region
        %s146 = ssub.s32 %s12, 1
      $region12: #{tpu_custom_call.1} parent=5 // pred_fallthru
        _
      %p147 = scmp.lt.s32.totalorder %s12, 2
      // Predicated region
      $region13: #{tpu_custom_call.1} parent=5 // pred_check
        %p148 = pneg %p147
      $region14: #{tpu_custom_call.1} parent=5 // pred_check_branch
        %150 = sbr.rel (%p148) target = $region16
      $region15: #{tpu_custom_call.1} parent=5 // pred_region
        // Predicated region
        $region17: #{tpu_custom_call.1} parent=15 // pred_check
          %p151 = pneg %p46
        $region18: #{tpu_custom_call.1} parent=15 // pred_check_branch
          %153 = sbr.rel (%p151) target = $region20
        $region19: #{tpu_custom_call.1} parent=15 // pred_region
          %s154 = smul.u32 2, %s19
          %p155 = scmp.lt.s32.totalorder %s154, 3
          %s156 = scalar_select %p155, %s154, 3
          %p157 = scmp.lt.s32.totalorder %s20, 0
          %s158 = scalar_select %p157, %s20, 0
          %s159 = sadd.s32 %s158, %s156
          %s160 = smul.addr %s159, 8
          %s161 = scalar_lea.vmem %s0, %s160
          %s162 = smul.u32 2, %s19
        $region20: #{tpu_custom_call.1} parent=15 // pred_fallthru
          _
        // Predicated region
        $region21: #{tpu_custom_call.1} parent=15 // pred_check
          %p163 = pneg %p72
        $region22: #{tpu_custom_call.1} parent=15 // pred_check_branch
          %165 = sbr.rel (%p163) target = $region24
        $region23: #{tpu_custom_call.1} parent=15 // pred_region
          %s166 = smul.u32 2, %s19
          %p167 = scmp.lt.s32.totalorder %s166, 3
          %s168 = scalar_select %p167, %s166, 3
          %s169 = smul.addr %s168, 4
          %s170 = smul.addr %s169, 8
          %s171 = scalar_lea.vmem %s1, %s170
          %s172 = smul.u32 2, %s19
        $region24: #{tpu_custom_call.1} parent=15 // pred_fallthru
          _
        // Predicated region
        $region25: #{tpu_custom_call.1} parent=15 // pred_check
          %p173 = pneg %p98
        $region26: #{tpu_custom_call.1} parent=15 // pred_check_branch
          %175 = sbr.rel (%p173) target = $region28
        $region27: #{tpu_custom_call.1} parent=15 // pred_region
          %s176 = smul.u32 2, %s19
          %p177 = scmp.lt.s32.totalorder %s176, 3
          %s178 = scalar_select %p177, %s176, 3
          %s179 = scalar_lea.vmem %s2, %s178
          %s180 = smul.u32 2, %s19
        $region28: #{tpu_custom_call.1} parent=15 // pred_fallthru
          _
      $region16: #{tpu_custom_call.1} parent=5 // pred_fallthru
        _
      %p181 = scmp.le.s32.totalorder 1, %s12
      %p182 = scmp.lt.s32.totalorder %s12, 3
      %p183 = pnand %p181, %p182
      %p184 = pneg %p183
      // Predicated region
      $region29: #{tpu_custom_call.1} parent=5 // pred_check
        _
      $region30: #{tpu_custom_call.1} parent=5 // pred_check_branch
        %186 = sbr.rel (%p183) target = $region32
      $region31: #{tpu_custom_call.1} parent=5 // pred_region
        %s187 = ssub.s32 %s12, 1
        %s188 = smul.u32 2, %s21
        %p189 = scmp.lt.s32.totalorder %s188, 3
        %s190 = scalar_select %p189, %s188, 3
        %p191 = scmp.lt.s32.totalorder %s22, 0
        %s192 = scalar_select %p191, %s22, 0
        %s193 = sadd.s32 %s192, %s190
        %s194 = smul.addr %s193, 8
        %s195 = scalar_lea.vmem %s0, %s194
        %p196 = pneg %p52
        %p197 = pneg %p49
        %s198 = smul.u32 2, %s21
        %p199 = scmp.lt.s32.totalorder %s198, 3
        %s200 = scalar_select %p199, %s198, 3
        %s201 = smul.addr %s200, 4
        %s202 = smul.addr %s201, 8
        %s203 = scalar_lea.vmem %s1, %s202
        %p204 = pneg %p78
        %p205 = pneg %p75
        %s206 = smul.u32 2, %s21
        %p207 = scmp.lt.s32.totalorder %s206, 3
        %s208 = scalar_select %p207, %s206, 3
        %s209 = scalar_lea.vmem %s2, %s208
        %p210 = pneg %p104
        %p211 = pneg %p101
        %p212 = pneg %p132
        %p213 = pneg %p129
        %s214 = sand.u32 %s119, 1
        %s215 = scalar_lea.sflag [#allocation3], %s214
        %s216 = sand.u32 %s119, 1
        %s217 = smul.addr %s216, 16
        %s218 = scalar_lea.vmem [#allocation2], %s217
        %s219 = smul.u32 2, %s21
        %p220 = scmp.lt.s32.totalorder %s219, 3
        %s221 = scalar_select %p220, %s219, 3
        %p222 = scmp.lt.s32.totalorder %s22, 0
        %s223 = scalar_select %p222, %s22, 0
        %s224 = sadd.s32 %s223, %s221
        %s225 = smul.addr %s224, 8
        %s226 = scalar_lea.vmem %s0, %s225
        %s227 = smul.u32 2, %s21
        %s228 = smul.u32 2, %s21
        %p229 = scmp.lt.s32.totalorder %s228, 3
        %s230 = scalar_select %p229, %s228, 3
        %s231 = smul.addr %s230, 4
        %s232 = smul.addr %s231, 8
        %s233 = scalar_lea.vmem %s1, %s232
        %s234 = smul.u32 2, %s21
        %s235 = smul.u32 2, %s21
        %p236 = scmp.lt.s32.totalorder %s235, 3
        %s237 = scalar_select %p236, %s235, 3
        %s238 = scalar_lea.vmem %s2, %s237
        %s239 = smul.u32 2, %s21
        %s240 = smul.u32 2, %s21
        %v241 = vld [vmem:[%s226] sm:$0xff]
        %v242 = vld [vmem:[%s226 + $0x8] sm:$0xff]
        %v243 = vld [vmem:[%s233] sm:$0xff]
        %v244 = vld [vmem:[%s233 + $0x8] sm:$0xff]
        %v245 = vld [vmem:[%s233 + $0x10] sm:$0xff]
        %v246 = vld [vmem:[%s233 + $0x18] sm:$0xff]
        %v247 = vld [vmem:[%s233 + $0x20] sm:$0xff]
        %v248 = vld [vmem:[%s233 + $0x28] sm:$0xff]
        %v249 = vld [vmem:[%s233 + $0x30] sm:$0xff]
        %v250 = vld [vmem:[%s233 + $0x38] sm:$0xff]
        %v251 = vld [vmem:[%s238] sm:$0x1]
        %v252 = vld [vmem:[%s238 + $0x1] sm:$0x1]
        %v255 = vperm.slane %v251, 0
        %v256 = vperm.slane %v252, 0
        %vm259 = vcmask 261120
        %v261 = vsel %vm259, %v241, 0
        %263 = vmatpush.msra.mxu0 0.0
        %264 = vmatpush.msra.mxu0 0.0
        %265 = vmatpush.msra.mxu0 0.0
        %266 = vmatpush.msra.mxu0 0.0
        %267 = vmatpush.msra.mxu0 0.0
        %268 = vmatpush.msra.mxu0 0.0
        %269 = vmatpush.msra.mxu0 0.0
        %270 = vmatpush.msra.mxu0 0.0
        %271 = vmatpush.msra.mxu0 0.0
        %272 = vmatpush.msra.mxu0 0.0
        %273 = vmatpush.msra.mxu0 0.0
        %274 = vmatpush.msra.mxu0 0.0
        %275 = vmatpush.msra.mxu0 %v246
        %276 = vmatpush.msra.mxu0 %v245
        %277 = vmatpush.msra.mxu0 %v244
        %278 = vmatpush.msra.mxu0 %v243
        %279 = vmatmul.f32.gmra.mxu0 %v261
        %v280 = vpop.f32.mrf.mxu0
        %v281 = vadd.f32 %v255, %v280
        %282 = vdwg.mxu0
        %v284 = vsel %vm259, %v242, 0
        %286 = vmatpush.msra.mxu0 0.0
        %287 = vmatpush.msra.mxu0 0.0
        %288 = vmatpush.msra.mxu0 0.0
        %289 = vmatpush.msra.mxu0 0.0
        %290 = vmatpush.msra.mxu0 0.0
        %291 = vmatpush.msra.mxu0 0.0
        %292 = vmatpush.msra.mxu0 0.0
        %293 = vmatpush.msra.mxu0 0.0
        %294 = vmatpush.msra.mxu0 0.0
        %295 = vmatpush.msra.mxu0 0.0
        %296 = vmatpush.msra.mxu0 0.0
        %297 = vmatpush.msra.mxu0 0.0
        %298 = vmatpush.msra.mxu0 %v250
        %299 = vmatpush.msra.mxu0 %v249
        %300 = vmatpush.msra.mxu0 %v248
        %301 = vmatpush.msra.mxu0 %v247
        %302 = vmatmul.f32.gmra.mxu0 %v284
        %v303 = vpop.f32.mrf.mxu0
        %v304 = vadd.f32 %v256, %v303
        %305 = vdwg.mxu0
        %vm306 = vcmask 130048
        %307 = vst.msk [vmem:[%s218] sm:$0xff] %vm306, %v281
        %308 = vst.msk [vmem:[%s218 + $0x8] sm:$0xff] %vm306, %v304
        %s309 = sand.u32 %s119, 1
        %s310 = scalar_lea.sflag [#allocation3], %s309
        %s311 = sand.u32 %s119, 1
        %s312 = smul.addr %s311, 16
        %s313 = scalar_lea.vmem [#allocation2], %s312
        // Predicated region
        $region33: #{tpu_custom_call.1} parent=31 // pred_check
          %p314 = pneg %p129
        $region34: #{tpu_custom_call.1} parent=31 // pred_check_branch
          %316 = sbr.rel (%p314) target = $region36
        $region35: #{tpu_custom_call.1} parent=31 // pred_region
          %s317 = smul.u32 2, %s21
          %319 = vsyncadd %s310, 0
          %s320 = sadd.s32 %s22, %s317
          %s321 = smul.addr %s320, 8
          %s322 = scalar_lea.hbm %s3, %s321
          %s323 = sshll.u32 %s313, 4
          %s324 = int_to_ptr.vmem [resolvable:$true] %s323
          %s325 = sshll.u32 %s322, 4
          %s326 = int_to_ptr.hbm [resolvable:$true] %s325
          %331 = dma.vmem_to_hbm [thread:$0]  %s324, 256, %s326, %s310, 128, 128, 8
        $region36: #{tpu_custom_call.1} parent=31 // pred_fallthru
          _
      $region32: #{tpu_custom_call.1} parent=5 // pred_fallthru
        _
      %p332 = scmp.le.s32.totalorder 2, %s12
      // Predicated region
      $region37: #{tpu_custom_call.1} parent=5 // pred_check
        %p333 = pneg %p332
      $region38: #{tpu_custom_call.1} parent=5 // pred_check_branch
        %335 = sbr.rel (%p333) target = $region40
      $region39: #{tpu_custom_call.1} parent=5 // pred_region
        %s336 = ssub.s32 %s12, 2
        // Predicated region
        $region41: #{tpu_custom_call.1} parent=39 // pred_check
          %p337 = pneg %p135
        $region42: #{tpu_custom_call.1} parent=39 // pred_check_branch
          %339 = sbr.rel (%p337) target = $region44
        $region43: #{tpu_custom_call.1} parent=39 // pred_region
          %s340 = sand.u32 %s120, 1
          %s341 = scalar_lea.sflag [#allocation3], %s340
          %s342 = sand.u32 %s120, 1
          %s343 = smul.addr %s342, 16
          %s344 = scalar_lea.vmem [#allocation2], %s343
          %346 = dma.done %s341, 256
        $region44: #{tpu_custom_call.1} parent=39 // pred_fallthru
          _
      $region40: #{tpu_custom_call.1} parent=5 // pred_fallthru
        _
    $region6: #{tpu_custom_call.1} parent=1 // loop_footer
      %s16 = sadd.s32 1, %s12
    $region7: #{tpu_custom_call.1} parent=1 // loop_footer_branch
      %11 = sbr.rel target = $region3
    $region8: #{tpu_custom_call.1} parent=1 // loop_exit
      _
    %347 = vsyncpa [#allocation3], 1
    %s348 = scalar_lea.sflag [#allocation3], 1
    %349 = vsyncpa %s348, 1

</llo_original>
